<compile_context>
chip_gen: v7x
topology: tpu7x:2x2x1
jax: 0.10.0
libtpu: 0.0.40
codegen_flags: <defaults>
</compile_context>

<pallas_src>
import jax
import jax.numpy as jnp
from jax import lax
from jax.experimental import pallas as pl
from jax.experimental.pallas import tpu as pltpu


# ---------------------------------------------------------------------------
# Fused Pallas kernel: one batch element per grid step.
# ---------------------------------------------------------------------------
def _self_attention_kernel(gamma_ref,        # SMEM (1, 1) f32
                           x_ref,            # (1, C, HW) bf16
                           wp_ref, bp_ref,   # (3P, C) bf16, (3P, 1) f32 (stacked f/g/h)
                           wv_ref, bv_ref,   # (C, P) bf16, (C, 1) f32
                           o_ref):           # (1, C, HW) f32
    P = wp_ref.shape[0] // 3
    x = x_ref[0]                                                        # (C, HW) bf16

    # --- stacked 1x1-conv projections: a single MXU matmul for f, g, h -------
    fgh = jnp.dot(wp_ref[...], x,
                  preferred_element_type=jnp.float32) + bp_ref[...]    # (3P, HW) f32
    f = fgh[0:P]                  # (P, HW); rows >= C//8 are exact zeros (padding)
    g = fgh[P:2 * P]              # (P, HW)
    h = fgh[2 * P:3 * P]          # (P, HW)

    # --- attention logits, produced transposed: t[j, i] = sum_c f[c,i]*g[c,j] --
    t = jnp.dot(jnp.transpose(g), f,
                preferred_element_type=jnp.float32)                    # (HW_j, HW_i)

    # --- softmax over keys j (= axis 0 of t); all math stays f32 -------------
    p = jnp.exp(t - jnp.max(t, axis=0, keepdims=True))                 # (HW_j, HW_i)
    inv_d = pl.reciprocal(jnp.sum(p, axis=0, keepdims=True),
                          approx=True)                                 # (1, HW_i)

    # Fold 1/denominator into h's columns: P*HW mults instead of HW*HW divides.
    h_n = (h * inv_d).astype(jnp.bfloat16)                             # (P, HW_i)

    # --- sa[c, j] = sum_i h_n[c, i] * p[j, i]  (trans-B contraction) ---------
    sa = lax.dot_general(h_n, p.astype(jnp.bfloat16),
                         (((1,), (1,)), ((), ())),
                         preferred_element_type=jnp.float32)           # (P, HW_j)

    # --- output 1x1 conv + gamma scale; lane-dense (C, HW) store -------------
    out = jnp.dot(wv_ref[...], sa.astype(jnp.bfloat16),
                  preferred_element_type=jnp.float32) + bv_ref[...]    # (C, HW)
    o_ref[0] = (gamma_ref[0, 0] * out).astype(o_ref.dtype)


# ---------------------------------------------------------------------------
# Wrapper
# ---------------------------------------------------------------------------
def self_attention(params, x_nchw):
    B, C, H, W = x_nchw.shape
    C8 = C // 8
    P = ((C8 + 7) // 8) * 8        # pad each projection to a full 8-row sublane group
    HW = H * W

    x_cw = x_nchw.reshape(B, C, HW).astype(jnp.bfloat16)       # single (C, HW) layout

    def pad_proj(w, b):            # (C8, C), (C8,) -> zero-padded (P, C), (P, 1)
        wp = jnp.zeros((P, C), jnp.float32).at[:C8].set(w.astype(jnp.float32))
        bp = jnp.zeros((P, 1), jnp.float32).at[:C8, 0].set(b.astype(jnp.float32))
        return wp, bp

    wf_p, bf_p = pad_proj(params["wf"], params["bf"])
    wg_p, bg_p = pad_proj(params["wg"], params["bg"])
    wh_p, bh_p = pad_proj(params["wh"], params["bh"])
    w_proj = jnp.concatenate([wf_p, wg_p, wh_p], axis=0).astype(jnp.bfloat16)  # (3P, C)
    b_proj = jnp.concatenate([bf_p, bg_p, bh_p], axis=0)                       # (3P, 1)

    wv_p = (jnp.zeros((C, P), jnp.float32)
            .at[:, :C8].set(params["wv"].astype(jnp.float32))
            .astype(jnp.bfloat16))                                             # (C, P)
    bv = params["bv"].reshape(C, 1).astype(jnp.float32)
    gamma = params["gamma"].reshape(1, 1).astype(jnp.float32)

    flops = 2 * B * (3 * P * C * HW + 2 * P * HW * HW + C * P * HW)
    transcendentals = B * (HW * HW + HW)                  # exp + approx reciprocal
    bytes_accessed = (B * C * HW * (2 + 4)                # x (bf16 in) + out (f32)
                      + 3 * P * C * 2 + 3 * P * 4         # stacked proj weight + bias
                      + C * P * 2 + C * 4 + 4)            # wv + bv + gamma

    out = pl.pallas_call(
        _self_attention_kernel,
        out_shape=jax.ShapeDtypeStruct((B, C, HW), jnp.float32),
        grid=(B,),
        in_specs=[
            pl.BlockSpec(memory_space=pltpu.MemorySpace.SMEM),     # gamma
            pl.BlockSpec((1, C, HW), lambda b: (b, 0, 0)),         # x  (C, HW)
            pl.BlockSpec((3 * P, C), lambda b: (0, 0)),            # stacked wf/wg/wh
            pl.BlockSpec((3 * P, 1), lambda b: (0, 0)),            # stacked bf/bg/bh
            pl.BlockSpec((C, P), lambda b: (0, 0)),                # wv (zero-padded cols)
            pl.BlockSpec((C, 1), lambda b: (0, 0)),                # bv
        ],
        out_specs=pl.BlockSpec((1, C, HW), lambda b: (b, 0, 0)),
        compiler_params=pltpu.CompilerParams(
            dimension_semantics=("parallel",),
            vmem_limit_bytes=32 * 1024 * 1024),
        cost_estimate=pl.CostEstimate(flops=flops,
                                      transcendentals=transcendentals,
                                      bytes_accessed=bytes_accessed),
    )(gamma, x_cw, w_proj, b_proj, wv_p, bv)

    return out.reshape(B, C, H, W)


# ---------------------------------------------------------------------------
# Deterministic parameter construction (mirrors the module's init scheme)
# ---------------------------------------------------------------------------
def init_params(key, C):
    C8 = C // 8
    ks = jax.random.split(key, 5)

    def xavier(k, shape):  # xavier_uniform_ on (out, in) 1x1 conv weights
        a = (6.0 / (shape[0] + shape[1])) ** 0.5
        return jax.random.uniform(k, shape, jnp.float32, -a, a)

    return dict(
        wf=xavier(ks[0], (C8, C)), bf=jnp.zeros((C8,), jnp.float32),  # init_conv zeroes bias
        wg=xavier(ks[1], (C8, C)), bg=jnp.zeros((C8,), jnp.float32),
        wh=xavier(ks[2], (C8, C)), bh=jnp.zeros((C8,), jnp.float32),
        wv=xavier(ks[3], (C, C8)),
        bv=0.1 * jax.random.normal(ks[4], (C,), jnp.float32),        # v keeps a non-zero bias
        # Module default is gamma=0 (output would be all zeros); use a non-zero
        # value so the compute path is actually exercised by the check.
        gamma=jnp.array([0.75], jnp.float32),
    )


# ---------------------------------------------------------------------------
# Pure-JAX reference (mirrors the PyTorch forward exactly, f32 highest precision)
# ---------------------------------------------------------------------------
def self_attention_ref(params, x):
    B, C, H, W = x.shape
    HW = H * W
    hp = jax.lax.Precision.HIGHEST
    xf = x.reshape(B, C, HW).astype(jnp.float32)
    f = jnp.einsum("oc,bcn->bon", params["wf"], xf, precision=hp) + params["bf"][None, :, None]
    g = jnp.einsum("oc,bcn->bon", params["wg"], xf, precision=hp) + params["bg"][None, :, None]
    h = jnp.einsum("oc,bcn->bon", params["wh"], xf, precision=hp) + params["bh"][None, :, None]
    att = jnp.einsum("bci,bcj->bij", f, g, precision=hp)
    att = jax.nn.softmax(att, axis=-1)
    sa = jnp.einsum("bci,bij->bcj", h, att, precision=hp)
    out = jnp.einsum("oc,bcn->bon", params["wv"], sa, precision=hp) + params["bv"][None, :, None]
    return (params["gamma"][0] * out).reshape(B, C, H, W)


# ---------------------------------------------------------------------------
if __name__ == "__main__":
    key = jax.random.PRNGKey(0)
    kp, kx = jax.random.split(key)

    B, C, H, W = 2, 32, 16, 16          # in_channel must be a multiple of 8; HW = 256
    x = jax.random.normal(kx, (B, C, H, W), jnp.float32)
    params = init_params(kp, C)

    fwd = jax.jit(self_attention)
    out = fwd(params, x)
    jax.block_until_ready(out)

    ref = self_attention_ref(params, x)
    assert out.shape == (B, C, H, W), out.shape
    assert bool(jnp.all(jnp.isfinite(out)))
    # bf16 MXU operands + approx reciprocal vs an f32-HIGHEST reference.
    assert bool(jnp.allclose(out, ref, atol=5e-2, rtol=5e-2)), (
        f"max abs err vs reference: {float(jnp.max(jnp.abs(out - ref)))}")
    print("KERNEL_OK")
</pallas_src>

<mosaic_0001>
module attributes {stable_mosaic.version = 11 : i64} {
  func.func @_self_attention_kernel(%arg0: i32, %arg1: memref<1x1xf32, #tpu.memory_space<smem>>, %arg2: memref<1x32x256xbf16, #tpu.memory_space<vmem>>, %arg3: memref<24x32xbf16, #tpu.memory_space<vmem>>, %arg4: memref<24x1xf32, #tpu.memory_space<vmem>>, %arg5: memref<32x8xbf16, #tpu.memory_space<vmem>>, %arg6: memref<32x1xf32, #tpu.memory_space<vmem>>, %arg7: memref<1x32x256xf32, #tpu.memory_space<vmem>>) attributes {dimension_semantics = [#tpu.dimension_semantics<parallel>], iteration_bounds = array<i64: 2>, scalar_prefetch = 0 : i64, scratch_operands = 0 : i64, tpu.core_type = #tpu.core_type<tc>, window_params = [{transform_indices = @transform_0, window_bounds = array<i64: 1, 1>}, {transform_indices = @transform_1, window_bounds = array<i64: 1, 32, 256>}, {pipeline_mode = #tpu.pipeline_mode<synchronous>, transform_indices = @transform_2, window_bounds = array<i64: 24, 32>}, {pipeline_mode = #tpu.pipeline_mode<synchronous>, transform_indices = @transform_3, window_bounds = array<i64: 24, 1>}, {pipeline_mode = #tpu.pipeline_mode<synchronous>, transform_indices = @transform_4, window_bounds = array<i64: 32, 8>}, {pipeline_mode = #tpu.pipeline_mode<synchronous>, transform_indices = @transform_5, window_bounds = array<i64: 32, 1>}, {transform_indices = @transform_6, window_bounds = array<i64: 1, 32, 256>}]} {
    %c0 = arith.constant 0 : index
    %c0_0 = arith.constant 0 : index
    %c0_1 = arith.constant 0 : index
    %0 = vector.load %arg2[%c0, %c0_0, %c0_1] : memref<1x32x256xbf16, #tpu.memory_space<vmem>>, vector<1x32x256xbf16>
    %1 = vector.shape_cast %0 : vector<1x32x256xbf16> to vector<32x256xbf16>
    %c0_2 = arith.constant 0 : index
    %c0_3 = arith.constant 0 : index
    %2 = vector.load %arg3[%c0_2, %c0_3] : memref<24x32xbf16, #tpu.memory_space<vmem>>, vector<24x32xbf16>
    %cst = arith.constant dense<0.000000e+00> : vector<24x256xf32>
    %3 = tpu.matmul %2, %1, %cst {dimension_numbers = #tpu.dot_dimension_numbers<[1], [0], [0], [1], [0, 0, 1, 1], [], []>} : vector<24x32xbf16>, vector<32x256xbf16>, vector<24x256xf32> -> vector<24x256xf32>
    %c0_4 = arith.constant 0 : index
    %c0_5 = arith.constant 0 : index
    %4 = vector.load %arg4[%c0_4, %c0_5] : memref<24x1xf32, #tpu.memory_space<vmem>>, vector<24x1xf32>
    %5 = vector.broadcast %4 : vector<24x1xf32> to vector<24x256xf32>
    %6 = arith.addf %3, %5 : vector<24x256xf32>
    %7 = vector.extract_strided_slice %6 {offsets = [0, 0], sizes = [8, 256], strides = [1, 1]} : vector<24x256xf32> to vector<8x256xf32>
    %8 = vector.extract_strided_slice %6 {offsets = [8, 0], sizes = [8, 256], strides = [1, 1]} : vector<24x256xf32> to vector<8x256xf32>
    %9 = vector.extract_strided_slice %6 {offsets = [16, 0], sizes = [8, 256], strides = [1, 1]} : vector<24x256xf32> to vector<8x256xf32>
    %10 = tpu.transpose %8, [1, 0] : vector<8x256xf32> -> vector<256x8xf32>
    %cst_6 = arith.constant dense<0.000000e+00> : vector<256x256xf32>
    %11 = tpu.matmul %10, %7, %cst_6 {dimension_numbers = #tpu.dot_dimension_numbers<[1], [0], [0], [1], [0, 0, 1, 1], [], []>} : vector<256x8xf32>, vector<8x256xf32>, vector<256x256xf32> -> vector<256x256xf32>
    %cst_7 = arith.constant dense<0xFF800000> : vector<256xf32>
    %12 = vector.multi_reduction <maximumf>, %11, %cst_7 [0] : vector<256x256xf32> to vector<256xf32>
    %13 = vector.shape_cast %12 : vector<256xf32> to vector<1x256xf32>
    %14 = vector.broadcast %13 : vector<1x256xf32> to vector<256x256xf32>
    %15 = arith.subf %11, %14 : vector<256x256xf32>
    %16 = math.exp %15 : vector<256x256xf32>
    %cst_8 = arith.constant dense<0.000000e+00> : vector<256xf32>
    %17 = vector.multi_reduction <add>, %16, %cst_8 [0] : vector<256x256xf32> to vector<256xf32>
    %18 = vector.shape_cast %17 : vector<256xf32> to vector<1x256xf32>
    %19 = tpu.reciprocal %18 {approx = true} : vector<1x256xf32> -> vector<1x256xf32>
    %20 = vector.broadcast %19 : vector<1x256xf32> to vector<8x256xf32>
    %21 = arith.mulf %9, %20 : vector<8x256xf32>
    %22 = arith.truncf %21 : vector<8x256xf32> to vector<8x256xbf16>
    %23 = arith.truncf %16 : vector<256x256xf32> to vector<256x256xbf16>
    %cst_9 = arith.constant dense<0.000000e+00> : vector<8x256xf32>
    %24 = tpu.matmul %22, %23, %cst_9 {dimension_numbers = #tpu.dot_dimension_numbers<[1], [1], [0], [0], [0, 0, 1, 0], [], []>} : vector<8x256xbf16>, vector<256x256xbf16>, vector<8x256xf32> -> vector<8x256xf32>
    %c0_10 = arith.constant 0 : index
    %c0_11 = arith.constant 0 : index
    %25 = vector.load %arg5[%c0_10, %c0_11] : memref<32x8xbf16, #tpu.memory_space<vmem>>, vector<32x8xbf16>
    %26 = arith.truncf %24 : vector<8x256xf32> to vector<8x256xbf16>
    %cst_12 = arith.constant dense<0.000000e+00> : vector<32x256xf32>
    %27 = tpu.matmul %25, %26, %cst_12 {dimension_numbers = #tpu.dot_dimension_numbers<[1], [0], [0], [1], [0, 0, 1, 1], [], []>} : vector<32x8xbf16>, vector<8x256xbf16>, vector<32x256xf32> -> vector<32x256xf32>
    %c0_13 = arith.constant 0 : index
    %c0_14 = arith.constant 0 : index
    %28 = vector.load %arg6[%c0_13, %c0_14] : memref<32x1xf32, #tpu.memory_space<vmem>>, vector<32x1xf32>
    %29 = vector.broadcast %28 : vector<32x1xf32> to vector<32x256xf32>
    %30 = arith.addf %27, %29 : vector<32x256xf32>
    %c0_15 = arith.constant 0 : index
    %c0_16 = arith.constant 0 : index
    %31 = memref.load %arg1[%c0_15, %c0_16] : memref<1x1xf32, #tpu.memory_space<smem>>
    %32 = vector.broadcast %31 : f32 to vector<32x256xf32>
    %33 = arith.mulf %32, %30 : vector<32x256xf32>
    %c0_17 = arith.constant 0 : index
    %c0_18 = arith.constant 0 : index
    %c0_19 = arith.constant 0 : index
    %34 = vector.load %arg7[%c0_17, %c0_18, %c0_19] : memref<1x32x256xf32, #tpu.memory_space<vmem>>, vector<1x32x256xf32>
    %35 = vector.shape_cast %34 : vector<1x32x256xf32> to vector<32x256xf32>
    %36 = vector.shape_cast %33 : vector<32x256xf32> to vector<1x32x256xf32>
    tpu.vector_store %arg7[%c0_17, %c0_18, %c0_19], %36 {strides = array<i32>} : memref<1x32x256xf32, #tpu.memory_space<vmem>>, vector<1x32x256xf32>,
    return
  }
  func.func @transform_0(%arg0: i32) -> (i32, i32) {
    %c0_i32 = arith.constant 0 : i32
    %c0_i32_0 = arith.constant 0 : i32
    %c0_i32_1 = arith.constant 0 : i32
    return %c0_i32, %c0_i32_0 : i32, i32
  }
  func.func @transform_1(%arg0: i32) -> (i32, i32, i32) {
    %c0_i32 = arith.constant 0 : i32
    %c0_i32_0 = arith.constant 0 : i32
    %c0_i32_1 = arith.constant 0 : i32
    return %arg0, %c0_i32, %c0_i32_0 : i32, i32, i32
  }
  func.func @transform_2(%arg0: i32) -> (i32, i32) {
    %c0_i32 = arith.constant 0 : i32
    %c0_i32_0 = arith.constant 0 : i32
    %c0_i32_1 = arith.constant 0 : i32
    return %c0_i32, %c0_i32_0 : i32, i32
  }
  func.func @transform_3(%arg0: i32) -> (i32, i32) {
    %c0_i32 = arith.constant 0 : i32
    %c0_i32_0 = arith.constant 0 : i32
    %c0_i32_1 = arith.constant 0 : i32
    return %c0_i32, %c0_i32_0 : i32, i32
  }
  func.func @transform_4(%arg0: i32) -> (i32, i32) {
    %c0_i32 = arith.constant 0 : i32
    %c0_i32_0 = arith.constant 0 : i32
    %c0_i32_1 = arith.constant 0 : i32
    return %c0_i32, %c0_i32_0 : i32, i32
  }
  func.func @transform_5(%arg0: i32) -> (i32, i32) {
    %c0_i32 = arith.constant 0 : i32
    %c0_i32_0 = arith.constant 0 : i32
    %c0_i32_1 = arith.constant 0 : i32
    return %c0_i32, %c0_i32_0 : i32, i32
  }
  func.func @transform_6(%arg0: i32) -> (i32, i32, i32) {
    %c0_i32 = arith.constant 0 : i32
    %c0_i32_0 = arith.constant 0 : i32
    %c0_i32_1 = arith.constant 0 : i32
    return %arg0, %c0_i32, %c0_i32_0 : i32, i32, i32
  }
}

</mosaic_0001>

<llo_original>
// kernel: self_attention.1
$region0: #{self_attention.1}
  #allocation0 [shape = 'u32[]', space=smem, size = 0x4, offset = 0x4, fixed_abs, tag = 'smem constant byte address 0x4 - core index']
  #allocation1 [shape = 'u32[144,128]{1,0:T(1,128)}', space=vmem, size = 0x12000, scoped, tag = 'internal scratch']
  #allocation2 [shape = 'f32[1,1]{1,0:T(1,128)S(6)}', space=smem, size = 0x200, scoped, tag = 'scoped memory for self_attention.1']
  %s0 = inlined_call_operand.<no memory space> [shape: f32[1,1], index: 0, kind: input, shape index: {}]
  %s1 = inlined_call_operand.vmem [shape: bf16[2,32,256], index: 1, kind: input, shape index: {}]
  %s2 = inlined_call_operand.vmem [shape: bf16[24,32], index: 2, kind: input, shape index: {}]
  %s3 = inlined_call_operand.vmem [shape: f32[24,1], index: 3, kind: input, shape index: {}]
  %s4 = inlined_call_operand.vmem [shape: bf16[32,8], index: 4, kind: input, shape index: {}]
  %s5 = inlined_call_operand.vmem [shape: f32[32,1], index: 5, kind: input, shape index: {}]
  %s6 = inlined_call_operand.vmem [shape: f32[2,32,256], index: 6, kind: output, shape index: {}]
  %s7 = sld [smem:[#allocation0]]
  $region57: #{self_attention.1} parent=0
    _
  %s9 = ssub.s32 1, %s7
  %s10 = scalar_select 0, %s9, %s7
  %11 = sst [smem:[#allocation2]] %s0
  loop: start=0, step=1, limit=4
  $region2: #{self_attention.1} parent=0 // loop_pre_header
    _
  $region3: #{self_attention.1} parent=0 // loop_header
    %s13 = sphi 0, %s17
    %p14 = scmp.ge.s32.totalorder %s13, 4
    %s21 = sphi 0, %s21
    %s23 = sphi 0, %s21
    %s24 = sphi 0, %s23
    %s38 = sphi 0, %s24
    %s44 = sphi 0, %s46
    %s47 = sphi 0, %s44
    %s48 = sphi 0, %s47
    %s64 = sphi 0, %s48
    %s68 = sphi 0, %s68
    %s70 = sphi 0, %s68
    %s71 = sphi 0, %s70
    %s85 = sphi 0, %s71
    %s89 = sphi 0, %s89
    %s91 = sphi 0, %s89
    %s92 = sphi 0, %s91
    %s106 = sphi 0, %s92
    %s110 = sphi 0, %s110
    %s112 = sphi 0, %s110
    %s113 = sphi 0, %s112
    %s127 = sphi 0, %s113
    %s131 = sphi 0, %s131
    %s133 = sphi 0, %s131
    %s134 = sphi 0, %s133
    %s148 = sphi 0, %s134
    %s154 = sphi 0, %s156
    %s157 = sphi 0, %s154
    %s158 = sphi 0, %s157
    %s174 = sphi 0, %s158
  $region4: #{self_attention.1} parent=0 // loop_header_branch
    %16 = sbr.rel (%p14) target = $region8
  $region5: #{self_attention.1} parent=0 // loop_body
    %s18 = ssub.s32 %s13, 1
    %s19 = ssub.s32 %s13, 2
    %s20 = sadd.s32 %s13, 1
    %s22 = sadd.s32 %s21, 1
    %p25 = scmp.eq.s32.totalorder %s13, 1
    %p26 = scmp.ne.s32.totalorder %s21, %s23
    %p27 = scmp.eq.s32.totalorder %s13, 0
    %p28 = por %p26, %p27
    %p29 = scmp.ne.s32.totalorder %s21, %s23
    %p30 = scmp.eq.s32.totalorder %s18, 1
    %p31 = por %p29, %p30
    %p32 = scmp.ne.s32.totalorder %s23, %s24
    %p33 = scmp.eq.s32.totalorder %s18, 0
    %p34 = por %p32, %p33
    %p35 = scmp.ne.s32.totalorder %s23, %s24
    %p36 = scmp.eq.s32.totalorder %s19, 1
    %p37 = por %p35, %p36
    %p39 = scmp.ne.s32.totalorder %s24, %s38
    %p40 = scmp.eq.s32.totalorder %s19, 0
    %p41 = por %p39, %p40
    %s42 = ssub.s32 %s13, %s20
    %p43 = scmp.eq.s32.totalorder %s42, 0
    %s45 = sadd.s32 %s44, 1
    %s46 = scalar_select %p43, %s44, %s45
    %p49 = pneg %p43
    %p50 = scmp.eq.s32.totalorder %s13, 1
    %p51 = por %p49, %p50
    %p52 = scmp.ne.s32.totalorder %s44, %s47
    %p53 = scmp.eq.s32.totalorder %s13, 0
    %p54 = por %p52, %p53
    %p55 = scmp.ne.s32.totalorder %s44, %s47
    %p56 = scmp.eq.s32.totalorder %s18, 1
    %p57 = por %p55, %p56
    %p58 = scmp.ne.s32.totalorder %s47, %s48
    %p59 = scmp.eq.s32.totalorder %s18, 0
    %p60 = por %p58, %p59
    %p61 = scmp.ne.s32.totalorder %s47, %s48
    %p62 = scmp.eq.s32.totalorder %s19, 1
    %p63 = por %p61, %p62
    %p65 = scmp.ne.s32.totalorder %s48, %s64
    %p66 = scmp.eq.s32.totalorder %s19, 0
    %p67 = por %p65, %p66
    %s69 = sadd.s32 %s68, 1
    %p72 = scmp.eq.s32.totalorder %s13, 1
    %p73 = scmp.ne.s32.totalorder %s68, %s70
    %p74 = scmp.eq.s32.totalorder %s13, 0
    %p75 = por %p73, %p74
    %p76 = scmp.ne.s32.totalorder %s68, %s70
    %p77 = scmp.eq.s32.totalorder %s18, 1
    %p78 = por %p76, %p77
    %p79 = scmp.ne.s32.totalorder %s70, %s71
    %p80 = scmp.eq.s32.totalorder %s18, 0
    %p81 = por %p79, %p80
    %p82 = scmp.ne.s32.totalorder %s70, %s71
    %p83 = scmp.eq.s32.totalorder %s19, 1
    %p84 = por %p82, %p83
    %p86 = scmp.ne.s32.totalorder %s71, %s85
    %p87 = scmp.eq.s32.totalorder %s19, 0
    %p88 = por %p86, %p87
    %s90 = sadd.s32 %s89, 1
    %p93 = scmp.eq.s32.totalorder %s13, 1
    %p94 = scmp.ne.s32.totalorder %s89, %s91
    %p95 = scmp.eq.s32.totalorder %s13, 0
    %p96 = por %p94, %p95
    %p97 = scmp.ne.s32.totalorder %s89, %s91
    %p98 = scmp.eq.s32.totalorder %s18, 1
    %p99 = por %p97, %p98
    %p100 = scmp.ne.s32.totalorder %s91, %s92
    %p101 = scmp.eq.s32.totalorder %s18, 0
    %p102 = por %p100, %p101
    %p103 = scmp.ne.s32.totalorder %s91, %s92
    %p104 = scmp.eq.s32.totalorder %s19, 1
    %p105 = por %p103, %p104
    %p107 = scmp.ne.s32.totalorder %s92, %s106
    %p108 = scmp.eq.s32.totalorder %s19, 0
    %p109 = por %p107, %p108
    %s111 = sadd.s32 %s110, 1
    %p114 = scmp.eq.s32.totalorder %s13, 1
    %p115 = scmp.ne.s32.totalorder %s110, %s112
    %p116 = scmp.eq.s32.totalorder %s13, 0
    %p117 = por %p115, %p116
    %p118 = scmp.ne.s32.totalorder %s110, %s112
    %p119 = scmp.eq.s32.totalorder %s18, 1
    %p120 = por %p118, %p119
    %p121 = scmp.ne.s32.totalorder %s112, %s113
    %p122 = scmp.eq.s32.totalorder %s18, 0
    %p123 = por %p121, %p122
    %p124 = scmp.ne.s32.totalorder %s112, %s113
    %p125 = scmp.eq.s32.totalorder %s19, 1
    %p126 = por %p124, %p125
    %p128 = scmp.ne.s32.totalorder %s113, %s127
    %p129 = scmp.eq.s32.totalorder %s19, 0
    %p130 = por %p128, %p129
    %s132 = sadd.s32 %s131, 1
    %p135 = scmp.eq.s32.totalorder %s13, 1
    %p136 = scmp.ne.s32.totalorder %s131, %s133
    %p137 = scmp.eq.s32.totalorder %s13, 0
    %p138 = por %p136, %p137
    %p139 = scmp.ne.s32.totalorder %s131, %s133
    %p140 = scmp.eq.s32.totalorder %s18, 1
    %p141 = por %p139, %p140
    %p142 = scmp.ne.s32.totalorder %s133, %s134
    %p143 = scmp.eq.s32.totalorder %s18, 0
    %p144 = por %p142, %p143
    %p145 = scmp.ne.s32.totalorder %s133, %s134
    %p146 = scmp.eq.s32.totalorder %s19, 1
    %p147 = por %p145, %p146
    %p149 = scmp.ne.s32.totalorder %s134, %s148
    %p150 = scmp.eq.s32.totalorder %s19, 0
    %p151 = por %p149, %p150
    %s152 = ssub.s32 %s13, %s20
    %p153 = scmp.eq.s32.totalorder %s152, 0
    %s155 = sadd.s32 %s154, 1
    %s156 = scalar_select %p153, %s154, %s155
    %p159 = pneg %p153
    %p160 = scmp.eq.s32.totalorder %s13, 1
    %p161 = por %p159, %p160
    %p162 = scmp.ne.s32.totalorder %s154, %s157
    %p163 = scmp.eq.s32.totalorder %s13, 0
    %p164 = por %p162, %p163
    %p165 = scmp.ne.s32.totalorder %s154, %s157
    %p166 = scmp.eq.s32.totalorder %s18, 1
    %p167 = por %p165, %p166
    %p168 = scmp.ne.s32.totalorder %s157, %s158
    %p169 = scmp.eq.s32.totalorder %s18, 0
    %p170 = por %p168, %p169
    %p171 = scmp.ne.s32.totalorder %s157, %s158
    %p172 = scmp.eq.s32.totalorder %s19, 1
    %p173 = por %p171, %p172
    %p175 = scmp.ne.s32.totalorder %s158, %s174
    %p176 = scmp.eq.s32.totalorder %s19, 0
    %p177 = por %p175, %p176
    %p178 = scmp.le.s32.totalorder 1, %s13
    %p179 = scmp.lt.s32.totalorder %s13, 3
    %p180 = pnand %p178, %p179
    %p181 = pneg %p180
    // Predicated region
    $region9: #{self_attention.1} parent=5 // pred_check
      _
    $region10: #{self_attention.1} parent=5 // pred_check_branch
      %183 = sbr.rel (%p180) target = $region12
    $region11: #{self_attention.1} parent=5 // pred_region
      %s184 = ssub.s32 %s13, 1
      // Predicated region
      $region13: #{self_attention.1} parent=11 // pred_check
        %p185 = pneg %p34
      $region14: #{self_attention.1} parent=11 // pred_check_branch
        %187 = sbr.rel (%p185) target = $region16
      $region15: #{self_attention.1} parent=11 // pred_region
        _
      $region16: #{self_attention.1} parent=11 // pred_fallthru
        _
      // Predicated region
      $region17: #{self_attention.1} parent=11 // pred_check
        %p188 = pneg %p81
      $region18: #{self_attention.1} parent=11 // pred_check_branch
        %190 = sbr.rel (%p188) target = $region20
      $region19: #{self_attention.1} parent=11 // pred_region
        _
      $region20: #{self_attention.1} parent=11 // pred_fallthru
        _
      // Predicated region
      $region21: #{self_attention.1} parent=11 // pred_check
        %p191 = pneg %p102
      $region22: #{self_attention.1} parent=11 // pred_check_branch
        %193 = sbr.rel (%p191) target = $region24
      $region23: #{self_attention.1} parent=11 // pred_region
        _
      $region24: #{self_attention.1} parent=11 // pred_fallthru
        _
      // Predicated region
      $region25: #{self_attention.1} parent=11 // pred_check
        %p194 = pneg %p123
      $region26: #{self_attention.1} parent=11 // pred_check_branch
        %196 = sbr.rel (%p194) target = $region28
      $region27: #{self_attention.1} parent=11 // pred_region
        _
      $region28: #{self_attention.1} parent=11 // pred_fallthru
        _
      // Predicated region
      $region29: #{self_attention.1} parent=11 // pred_check
        %p197 = pneg %p144
      $region30: #{self_attention.1} parent=11 // pred_check_branch
        %199 = sbr.rel (%p197) target = $region32
      $region31: #{self_attention.1} parent=11 // pred_region
        _
      $region32: #{self_attention.1} parent=11 // pred_fallthru
        _
    $region12: #{self_attention.1} parent=5 // pred_fallthru
      _
    %p200 = scmp.lt.s32.totalorder %s13, 2
    // Predicated region
    $region33: #{self_attention.1} parent=5 // pred_check
      %p201 = pneg %p200
    $region34: #{self_attention.1} parent=5 // pred_check_branch
      %203 = sbr.rel (%p201) target = $region36
    $region35: #{self_attention.1} parent=5 // pred_region
      // Predicated region
      $region37: #{self_attention.1} parent=35 // pred_check
        %p204 = pneg %p54
      $region38: #{self_attention.1} parent=35 // pred_check_branch
        %206 = sbr.rel (%p204) target = $region40
      $region39: #{self_attention.1} parent=35 // pred_region
        %p207 = scmp.lt.s32.totalorder %s13, 1
        %s208 = scalar_select %p207, %s13, 1
        %s209 = smul.addr %s208, 8
        %s210 = smul.addr %s209, 4
        %s211 = scalar_lea.vmem %s1, %s210
      $region40: #{self_attention.1} parent=35 // pred_fallthru
        _
    $region36: #{self_attention.1} parent=5 // pred_fallthru
      _
    %p212 = scmp.le.s32.totalorder 1, %s13
    %p213 = scmp.lt.s32.totalorder %s13, 3
    %p214 = pnand %p212, %p213
    %p215 = pneg %p214
    // Predicated region
    $region41: #{self_attention.1} parent=5 // pred_check
      _
    $region42: #{self_attention.1} parent=5 // pred_check_branch
      %217 = sbr.rel (%p214) target = $region44
    $region43: #{self_attention.1} parent=5 // pred_region
      %s218 = ssub.s32 %s13, 1
      %p219 = pneg %p34
      %p220 = pneg %p31
      %p221 = scmp.lt.s32.totalorder %s18, 1
      %s222 = scalar_select %p221, %s18, 1
      %s223 = smul.addr %s222, 8
      %s224 = smul.addr %s223, 4
      %s225 = scalar_lea.vmem %s1, %s224
      %p226 = pneg %p60
      %p227 = pneg %p57
      %p228 = pneg %p81
      %p229 = pneg %p78
      %p230 = pneg %p102
      %p231 = pneg %p99
      %p232 = pneg %p123
      %p233 = pneg %p120
      %p234 = pneg %p144
      %p235 = pneg %p141
      %p236 = pneg %p170
      %p237 = pneg %p167
      %p238 = scmp.lt.s32.totalorder %s18, 1
      %s239 = scalar_select %p238, %s18, 1
      %s240 = smul.addr %s239, 8
      %s241 = smul.addr %s240, 8
      %s242 = scalar_lea.vmem %s6, %s241
      %p243 = scmp.lt.s32.totalorder %s18, 1
      %s244 = scalar_select %p243, %s18, 1
      %s245 = smul.addr %s244, 8
      %s246 = smul.addr %s245, 4
      %s247 = scalar_lea.vmem %s1, %s246
      %p248 = scmp.lt.s32.totalorder %s18, 1
      %s249 = scalar_select %p248, %s18, 1
      %s250 = smul.addr %s249, 8
      %s251 = smul.addr %s250, 8
      %s252 = scalar_lea.vmem %s6, %s251
      %v254 = vld [vmem:[%s247] sm:$0xff]
      %v255 = vld [vmem:[%s247 + $0x8] sm:$0xff]
      %v256 = vld [vmem:[%s247 + $0x10] sm:$0xff]
      %v257 = vld [vmem:[%s247 + $0x18] sm:$0xff]
      %v258 = vld [vmem:[%s2] sm:$0xf]
      %v259 = vld [vmem:[%s2 + $0x4] sm:$0xf]
      %v260 = vld [vmem:[%s2 + $0x8] sm:$0xf]
      %v261 = vld [vmem:[%s3] sm:$0xff]
      %v262 = vld [vmem:[%s3 + $0x8] sm:$0xff]
      %v263 = vld [vmem:[%s3 + $0x10] sm:$0xff]
      %265 = vset.pattern.permute.xlu0 0
      %266 = vperm.xlu0 %265, %v261
      %v267 = vpop.permute.xlu0 %266
      %270 = vset.pattern.permute.xlu0 0
      %271 = vperm.xlu0 %270, %v262
      %v272 = vpop.permute.xlu0 %271
      %275 = vset.pattern.permute.xlu0 0
      %276 = vperm.xlu0 %275, %v263
      %v277 = vpop.permute.xlu0 %276
      %v282 = vunpack.c.l.b16 %v258
      %v283 = vunpack.c.l.b16 %v259
      %v284 = vunpack.c.l.b16 %v260
      %v285 = vpack.c.b16 %v283, %v282
      %v286 = vpack.c.b16 %v284, %v284
      %v291 = vunpack.c.l.b16 %v254
      %v292 = vunpack.c.h.b16 %v254
      %v293 = vunpack.c.l.b16 %v255
      %v294 = vunpack.c.h.b16 %v255
      %v295 = vunpack.c.l.b16 %v256
      %v296 = vunpack.c.h.b16 %v256
      %v297 = vunpack.c.l.b16 %v257
      %v298 = vunpack.c.h.b16 %v257
      %v299 = vpack.c.b16 %v293, %v291
      %v300 = vpack.c.b16 %v294, %v292
      %v301 = vpack.c.b16 %v297, %v295
      %v302 = vpack.c.b16 %v298, %v296
      %vm307 = vcmask 261120
      %v309 = vsel %vm307, %v285, 0
      %v312 = vsel %vm307, %v286, 0
      %314 = vmatprep.subr.bf16.mxu0 %v300
      %315 = vmatpush1.bf16.msra.mxu0 %v299
      %316 = vmatprep.subr.bf16.mxu0 %v302
      %317 = vmatpush1.bf16.msra.mxu0 %v301
      %318 = vmatprep.subr.bf16.mxu0 0
      %319 = vmatpush1.bf16.msra.mxu0 0
      %320 = vmatprep.subr.bf16.mxu0 0
      %321 = vmatpush1.bf16.msra.mxu0 0
      %322 = vmatprep.subr.bf16.mxu0 0
      %323 = vmatpush1.bf16.msra.mxu0 0
      %324 = vmatprep.subr.bf16.mxu0 0
      %325 = vmatpush1.bf16.msra.mxu0 0
      %326 = vmatprep.subr.bf16.mxu0 0
      %327 = vmatpush1.bf16.msra.mxu0 0
      %328 = vmatprep.subr.bf16.mxu0 0
      %329 = vmatpush1.bf16.msra.mxu0 0
      %330 = vmatprep.subr.bf16.mxu0 0
      %331 = vmatpush1.bf16.msra.mxu0 0
      %332 = vmatprep.subr.bf16.mxu0 0
      %333 = vmatpush1.bf16.msra.mxu0 0
      %334 = vmatprep.subr.bf16.mxu0 0
      %335 = vmatpush1.bf16.msra.mxu0 0
      %336 = vmatprep.subr.bf16.mxu0 0
      %337 = vmatpush1.bf16.msra.mxu0 0
      %338 = vmatprep.subr.bf16.mxu0 0
      %339 = vmatpush1.bf16.msra.mxu0 0
      %340 = vmatprep.subr.bf16.mxu0 0
      %341 = vmatpush1.bf16.msra.mxu0 0
      %342 = vmatprep.subr.bf16.mxu0 0
      %343 = vmatpush1.bf16.msra.mxu0 0
      %344 = vmatprep.subr.bf16.mxu0 0
      %345 = vmatpush1.bf16.msra.mxu0 0
      %346 = vmatprep.mubr.bf16.mxu0 0
      %347 = vmatmul.mubr.bf16.gmra.mrb[0].mxu0 %v309
      %v348 = vpop.f32.mrb[0].mxu0
      %v349 = vadd.f32 %v267, %v348
      %v350 = vpop.f32.mrb[0].mxu0
      %v351 = vadd.f32 %v267, %v350
      %v352 = vpop.f32.mrb[0].mxu0
      %v353 = vadd.f32 %v272, %v352
      %v354 = vpop.f32.mrb[0].mxu0
      %v355 = vadd.f32 %v272, %v354
      %356 = vmatprep.mubr.bf16.mxu0 0
      %357 = vmatmul.mubr.bf16.gmra.mrb[0].mxu0 %v312
      %v358 = vpop.f32.mrb[0].mxu0
      %v359 = vadd.f32 %v277, %v358
      %v360 = vpop.f32.mrb[0].mxu0
      %v361 = vadd.f32 %v277, %v360
      %v362 = vpop.f32.mrb[0].mxu0
      %v363 = vpop.f32.mrb[0].mxu0
      %364 = vdwg.mxu0
      %365 = vxpose.xlu0.b32.start [1/16] %v353, 128
      %366 = vxpose.xlu0.b32.cont [2/16] 0.0, 128
      %367 = vxpose.xlu0.b32.cont [3/16] 0.0, 128
      %368 = vxpose.xlu0.b32.cont [4/16] 0.0, 128
      %369 = vxpose.xlu0.b32.cont [5/16] 0.0, 128
      %370 = vxpose.xlu0.b32.cont [6/16] 0.0, 128
      %371 = vxpose.xlu0.b32.cont [7/16] 0.0, 128
      %372 = vxpose.xlu0.b32.cont [8/16] 0.0, 128
      %373 = vxpose.xlu0.b32.cont [9/16] 0.0, 128
      %374 = vxpose.xlu0.b32.cont [10/16] 0.0, 128
      %375 = vxpose.xlu0.b32.cont [11/16] 0.0, 128
      %376 = vxpose.xlu0.b32.cont [12/16] 0.0, 128
      %377 = vxpose.xlu0.b32.cont [13/16] 0.0, 128
      %378 = vxpose.xlu0.b32.cont [14/16] 0.0, 128
      %379 = vxpose.xlu0.b32.cont [15/16] 0.0, 128
      %380 = vxpose.xlu0.b32.end [16/16] 0.0, 128
      %v381 = vpop.trf.xlu0
      %v382 = vpop.trf.xlu0
      %v383 = vpop.trf.xlu0
      %v384 = vpop.trf.xlu0
      %v385 = vpop.trf.xlu0
      %v386 = vpop.trf.xlu0
      %v387 = vpop.trf.xlu0
      %v388 = vpop.trf.xlu0
      %v389 = vpop.trf.xlu0
      %v390 = vpop.trf.xlu0
      %v391 = vpop.trf.xlu0
      %v392 = vpop.trf.xlu0
      %v393 = vpop.trf.xlu0
      %v394 = vpop.trf.xlu0
      %v395 = vpop.trf.xlu0
      %v396 = vpop.trf.xlu0
      %397 = vxpose.xlu0.b32.start [1/16] %v355, 128
      %398 = vxpose.xlu0.b32.cont [2/16] 0.0, 128
      %399 = vxpose.xlu0.b32.cont [3/16] 0.0, 128
      %400 = vxpose.xlu0.b32.cont [4/16] 0.0, 128
      %401 = vxpose.xlu0.b32.cont [5/16] 0.0, 128
      %402 = vxpose.xlu0.b32.cont [6/16] 0.0, 128
      %403 = vxpose.xlu0.b32.cont [7/16] 0.0, 128
      %404 = vxpose.xlu0.b32.cont [8/16] 0.0, 128
      %405 = vxpose.xlu0.b32.cont [9/16] 0.0, 128
      %406 = vxpose.xlu0.b32.cont [10/16] 0.0, 128
      %407 = vxpose.xlu0.b32.cont [11/16] 0.0, 128
      %408 = vxpose.xlu0.b32.cont [12/16] 0.0, 128
      %409 = vxpose.xlu0.b32.cont [13/16] 0.0, 128
      %410 = vxpose.xlu0.b32.cont [14/16] 0.0, 128
      %411 = vxpose.xlu0.b32.cont [15/16] 0.0, 128
      %412 = vxpose.xlu0.b32.end [16/16] 0.0, 128
      %v413 = vpop.trf.xlu0
      %v414 = vpop.trf.xlu0
      %v415 = vpop.trf.xlu0
      %v416 = vpop.trf.xlu0
      %v417 = vpop.trf.xlu0
      %v418 = vpop.trf.xlu0
      %v419 = vpop.trf.xlu0
      %v420 = vpop.trf.xlu0
      %v421 = vpop.trf.xlu0
      %v422 = vpop.trf.xlu0
      %v423 = vpop.trf.xlu0
      %v424 = vpop.trf.xlu0
      %v425 = vpop.trf.xlu0
      %v426 = vpop.trf.xlu0
      %v427 = vpop.trf.xlu0
      %v428 = vpop.trf.xlu0
      %vm429 = vcmask 64512
      %v431 = vsel %vm429, %v381, 0
      %v434 = vsel %vm429, %v382, 0
      %v437 = vsel %vm429, %v383, 0
      %v440 = vsel %vm429, %v384, 0
      %v443 = vsel %vm429, %v385, 0
      %v446 = vsel %vm429, %v386, 0
      %v449 = vsel %vm429, %v387, 0
      %v452 = vsel %vm429, %v388, 0
      %v455 = vsel %vm429, %v389, 0
      %v458 = vsel %vm429, %v390, 0
      %v461 = vsel %vm429, %v391, 0
      %v464 = vsel %vm429, %v392, 0
      %v467 = vsel %vm429, %v393, 0
      %v470 = vsel %vm429, %v394, 0
      %v473 = vsel %vm429, %v395, 0
      %v476 = vsel %vm429, %v396, 0
      %v479 = vsel %vm429, %v413, 0
      %v482 = vsel %vm429, %v414, 0
      %v485 = vsel %vm429, %v415, 0
      %v488 = vsel %vm429, %v416, 0
      %v491 = vsel %vm429, %v417, 0
      %v494 = vsel %vm429, %v418, 0
      %v497 = vsel %vm429, %v419, 0
      %v500 = vsel %vm429, %v420, 0
      %v503 = vsel %vm429, %v421, 0
      %v506 = vsel %vm429, %v422, 0
      %v509 = vsel %vm429, %v423, 0
      %v512 = vsel %vm429, %v424, 0
      %v515 = vsel %vm429, %v425, 0
      %v518 = vsel %vm429, %v426, 0
      %v521 = vsel %vm429, %v427, 0
      %v524 = vsel %vm429, %v428, 0
      %526 = vmatprep.subr.mxu0 %v351
      %527 = vmatpush1.msra.mxu0 %v349
      %528 = vmatprep.subr.mxu0 0.0
      %529 = vmatpush1.msra.mxu0 0.0
      %530 = vmatprep.subr.mxu0 0.0
      %531 = vmatpush1.msra.mxu0 0.0
      %532 = vmatprep.subr.mxu0 0.0
      %533 = vmatpush1.msra.mxu0 0.0
      %534 = vmatprep.subr.mxu0 0.0
      %535 = vmatpush1.msra.mxu0 0.0
      %536 = vmatprep.subr.mxu0 0.0
      %537 = vmatpush1.msra.mxu0 0.0
      %538 = vmatprep.subr.mxu0 0.0
      %539 = vmatpush1.msra.mxu0 0.0
      %540 = vmatprep.subr.mxu0 0.0
      %541 = vmatpush1.msra.mxu0 0.0
      %542 = vmatprep.subr.mxu0 0.0
      %543 = vmatpush1.msra.mxu0 0.0
      %544 = vmatprep.subr.mxu0 0.0
      %545 = vmatpush1.msra.mxu0 0.0
      %546 = vmatprep.subr.mxu0 0.0
      %547 = vmatpush1.msra.mxu0 0.0
      %548 = vmatprep.subr.mxu0 0.0
      %549 = vmatpush1.msra.mxu0 0.0
      %550 = vmatprep.subr.mxu0 0.0
      %551 = vmatpush1.msra.mxu0 0.0
      %552 = vmatprep.subr.mxu0 0.0
      %553 = vmatpush1.msra.mxu0 0.0
      %554 = vmatprep.subr.mxu0 0.0
      %555 = vmatpush1.msra.mxu0 0.0
      %556 = vmatprep.subr.mxu0 0.0
      %557 = vmatpush1.msra.mxu0 0.0
      %558 = vmatprep.subr.mxu0 0.0
      %559 = vmatpush1.msra.mxu0 0.0
      %560 = vmatprep.subr.mxu0 0.0
      %561 = vmatpush1.msra.mxu0 0.0
      %562 = vmatprep.subr.mxu0 0.0
      %563 = vmatpush1.msra.mxu0 0.0
      %564 = vmatprep.subr.mxu0 0.0
      %565 = vmatpush1.msra.mxu0 0.0
      %566 = vmatprep.subr.mxu0 0.0
      %567 = vmatpush1.msra.mxu0 0.0
      %568 = vmatprep.subr.mxu0 0.0
      %569 = vmatpush1.msra.mxu0 0.0
      %570 = vmatprep.subr.mxu0 0.0
      %571 = vmatpush1.msra.mxu0 0.0
      %572 = vmatprep.subr.mxu0 0.0
      %573 = vmatpush1.msra.mxu0 0.0
      %574 = vmatprep.subr.mxu0 0.0
      %575 = vmatpush1.msra.mxu0 0.0
      %576 = vmatprep.subr.mxu0 0.0
      %577 = vmatpush1.msra.mxu0 0.0
      %578 = vmatprep.subr.mxu0 0.0
      %579 = vmatpush1.msra.mxu0 0.0
      %580 = vmatprep.subr.mxu0 0.0
      %581 = vmatpush1.msra.mxu0 0.0
      %582 = vmatprep.subr.mxu0 0.0
      %583 = vmatpush1.msra.mxu0 0.0
      %584 = vmatprep.subr.mxu0 0.0
      %585 = vmatpush1.msra.mxu0 0.0
      %586 = vmatprep.subr.mxu0 0.0
      %587 = vmatpush1.msra.mxu0 0.0
      %588 = vmatprep.subr.mxu0 0.0
      %589 = vmatpush1.msra.mxu0 0.0
      %590 = vmatprep.mubr.f32.mxu0 0.0
      %591 = vmatmul.mubr.f32.gmra.mrb[0].mxu0 %v431
      %v592 = vpop.f32.mrb[0].mxu0
      %v593 = vadd.f32 0.0, %v592
      %v594 = vpop.f32.mrb[0].mxu0
      %v595 = vadd.f32 0.0, %v594
      %596 = vmatprep.mubr.f32.mxu0 0.0
      %597 = vmatmul.mubr.f32.gmra.mrb[0].mxu0 %v434
      %v598 = vpop.f32.mrb[0].mxu0
      %v599 = vadd.f32 0.0, %v598
      %v600 = vpop.f32.mrb[0].mxu0
      %v601 = vadd.f32 0.0, %v600
      %602 = vmatprep.mubr.f32.mxu0 0.0
      %603 = vmatmul.mubr.f32.gmra.mrb[0].mxu0 %v437
      %v604 = vpop.f32.mrb[0].mxu0
      %v605 = vadd.f32 0.0, %v604
      %v606 = vpop.f32.mrb[0].mxu0
      %v607 = vadd.f32 0.0, %v606
      %608 = vmatprep.mubr.f32.mxu0 0.0
      %609 = vmatmul.mubr.f32.gmra.mrb[0].mxu0 %v440
      %v610 = vpop.f32.mrb[0].mxu0
      %v611 = vadd.f32 0.0, %v610
      %v612 = vpop.f32.mrb[0].mxu0
      %v613 = vadd.f32 0.0, %v612
      %614 = vmatprep.mubr.f32.mxu0 0.0
      %615 = vmatmul.mubr.f32.gmra.mrb[0].mxu0 %v443
      %v616 = vpop.f32.mrb[0].mxu0
      %v617 = vadd.f32 0.0, %v616
      %v618 = vpop.f32.mrb[0].mxu0
      %v619 = vadd.f32 0.0, %v618
      %620 = vmatprep.mubr.f32.mxu0 0.0
      %621 = vmatmul.mubr.f32.gmra.mrb[0].mxu0 %v446
      %v622 = vpop.f32.mrb[0].mxu0
      %v623 = vadd.f32 0.0, %v622
      %v624 = vpop.f32.mrb[0].mxu0
      %v625 = vadd.f32 0.0, %v624
      %626 = vmatprep.mubr.f32.mxu0 0.0
      %627 = vmatmul.mubr.f32.gmra.mrb[0].mxu0 %v449
      %v628 = vpop.f32.mrb[0].mxu0
      %v629 = vadd.f32 0.0, %v628
      %v630 = vpop.f32.mrb[0].mxu0
      %v631 = vadd.f32 0.0, %v630
      %632 = vmatprep.mubr.f32.mxu0 0.0
      %633 = vmatmul.mubr.f32.gmra.mrb[0].mxu0 %v452
      %v634 = vpop.f32.mrb[0].mxu0
      %v635 = vadd.f32 0.0, %v634
      %v636 = vpop.f32.mrb[0].mxu0
      %v637 = vadd.f32 0.0, %v636
      %638 = vmatprep.mubr.f32.mxu0 0.0
      %639 = vmatmul.mubr.f32.gmra.mrb[0].mxu0 %v455
      %v640 = vpop.f32.mrb[0].mxu0
      %v641 = vadd.f32 0.0, %v640
      %v642 = vpop.f32.mrb[0].mxu0
      %v643 = vadd.f32 0.0, %v642
      %644 = vmatprep.mubr.f32.mxu0 0.0
      %645 = vmatmul.mubr.f32.gmra.mrb[0].mxu0 %v458
      %v646 = vpop.f32.mrb[0].mxu0
      %v647 = vadd.f32 0.0, %v646
      %v648 = vpop.f32.mrb[0].mxu0
      %v649 = vadd.f32 0.0, %v648
      %650 = vmatprep.mubr.f32.mxu0 0.0
      %651 = vmatmul.mubr.f32.gmra.mrb[0].mxu0 %v461
      %v652 = vpop.f32.mrb[0].mxu0
      %v653 = vadd.f32 0.0, %v652
      %v654 = vpop.f32.mrb[0].mxu0
      %v655 = vadd.f32 0.0, %v654
      %656 = vmatprep.mubr.f32.mxu0 0.0
      %657 = vmatmul.mubr.f32.gmra.mrb[0].mxu0 %v464
      %v658 = vpop.f32.mrb[0].mxu0
      %v659 = vadd.f32 0.0, %v658
      %v660 = vpop.f32.mrb[0].mxu0
      %v661 = vadd.f32 0.0, %v660
      %662 = vmatprep.mubr.f32.mxu0 0.0
      %663 = vmatmul.mubr.f32.gmra.mrb[0].mxu0 %v467
      %v664 = vpop.f32.mrb[0].mxu0
      %v665 = vadd.f32 0.0, %v664
      %v666 = vpop.f32.mrb[0].mxu0
      %v667 = vadd.f32 0.0, %v666
      %668 = vmatprep.mubr.f32.mxu0 0.0
      %669 = vmatmul.mubr.f32.gmra.mrb[0].mxu0 %v470
      %v670 = vpop.f32.mrb[0].mxu0
      %v671 = vadd.f32 0.0, %v670
      %v672 = vpop.f32.mrb[0].mxu0
      %v673 = vadd.f32 0.0, %v672
      %674 = vmatprep.mubr.f32.mxu0 0.0
      %675 = vmatmul.mubr.f32.gmra.mrb[0].mxu0 %v473
      %v676 = vpop.f32.mrb[0].mxu0
      %v677 = vadd.f32 0.0, %v676
      %v678 = vpop.f32.mrb[0].mxu0
      %v679 = vadd.f32 0.0, %v678
      %680 = vmatprep.mubr.f32.mxu0 0.0
      %681 = vmatmul.mubr.f32.gmra.mrb[0].mxu0 %v476
      %v682 = vpop.f32.mrb[0].mxu0
      %v683 = vadd.f32 0.0, %v682
      %v684 = vpop.f32.mrb[0].mxu0
      %v685 = vadd.f32 0.0, %v684
      %686 = vmatprep.mubr.f32.mxu0 0.0
      %687 = vmatmul.mubr.f32.gmra.mrb[0].mxu0 %v479
      %v688 = vpop.f32.mrb[0].mxu0
      %v689 = vadd.f32 0.0, %v688
      %v690 = vpop.f32.mrb[0].mxu0
      %v691 = vadd.f32 0.0, %v690
      %692 = vmatprep.mubr.f32.mxu0 0.0
      %693 = vmatmul.mubr.f32.gmra.mrb[0].mxu0 %v482
      %v694 = vpop.f32.mrb[0].mxu0
      %v695 = vadd.f32 0.0, %v694
      %v696 = vpop.f32.mrb[0].mxu0
      %v697 = vadd.f32 0.0, %v696
      %698 = vmatprep.mubr.f32.mxu0 0.0
      %699 = vmatmul.mubr.f32.gmra.mrb[0].mxu0 %v485
      %v700 = vpop.f32.mrb[0].mxu0
      %v701 = vadd.f32 0.0, %v700
      %v702 = vpop.f32.mrb[0].mxu0
      %v703 = vadd.f32 0.0, %v702
      %704 = vmatprep.mubr.f32.mxu0 0.0
      %705 = vmatmul.mubr.f32.gmra.mrb[0].mxu0 %v488
      %v706 = vpop.f32.mrb[0].mxu0
      %v707 = vadd.f32 0.0, %v706
      %v708 = vpop.f32.mrb[0].mxu0
      %v709 = vadd.f32 0.0, %v708
      %710 = vmatprep.mubr.f32.mxu0 0.0
      %711 = vmatmul.mubr.f32.gmra.mrb[0].mxu0 %v491
      %v712 = vpop.f32.mrb[0].mxu0
      %v713 = vadd.f32 0.0, %v712
      %v714 = vpop.f32.mrb[0].mxu0
      %v715 = vadd.f32 0.0, %v714
      %716 = vmatprep.mubr.f32.mxu0 0.0
      %717 = vmatmul.mubr.f32.gmra.mrb[0].mxu0 %v494
      %v718 = vpop.f32.mrb[0].mxu0
      %v719 = vadd.f32 0.0, %v718
      %v720 = vpop.f32.mrb[0].mxu0
      %v721 = vadd.f32 0.0, %v720
      %722 = vmatprep.mubr.f32.mxu0 0.0
      %723 = vmatmul.mubr.f32.gmra.mrb[0].mxu0 %v497
      %v724 = vpop.f32.mrb[0].mxu0
      %v725 = vadd.f32 0.0, %v724
      %v726 = vpop.f32.mrb[0].mxu0
      %v727 = vadd.f32 0.0, %v726
      %728 = vmatprep.mubr.f32.mxu0 0.0
      %729 = vmatmul.mubr.f32.gmra.mrb[0].mxu0 %v500
      %v730 = vpop.f32.mrb[0].mxu0
      %v731 = vadd.f32 0.0, %v730
      %v732 = vpop.f32.mrb[0].mxu0
      %v733 = vadd.f32 0.0, %v732
      %734 = vmatprep.mubr.f32.mxu0 0.0
      %735 = vmatmul.mubr.f32.gmra.mrb[0].mxu0 %v503
      %v736 = vpop.f32.mrb[0].mxu0
      %v737 = vadd.f32 0.0, %v736
      %v738 = vpop.f32.mrb[0].mxu0
      %v739 = vadd.f32 0.0, %v738
      %740 = vmatprep.mubr.f32.mxu0 0.0
      %741 = vmatmul.mubr.f32.gmra.mrb[0].mxu0 %v506
      %v742 = vpop.f32.mrb[0].mxu0
      %v743 = vadd.f32 0.0, %v742
      %v744 = vpop.f32.mrb[0].mxu0
      %v745 = vadd.f32 0.0, %v744
      %746 = vmatprep.mubr.f32.mxu0 0.0
      %747 = vmatmul.mubr.f32.gmra.mrb[0].mxu0 %v509
      %v748 = vpop.f32.mrb[0].mxu0
      %v749 = vadd.f32 0.0, %v748
      %v750 = vpop.f32.mrb[0].mxu0
      %v751 = vadd.f32 0.0, %v750
      %752 = vmatprep.mubr.f32.mxu0 0.0
      %753 = vmatmul.mubr.f32.gmra.mrb[0].mxu0 %v512
      %v754 = vpop.f32.mrb[0].mxu0
      %v755 = vadd.f32 0.0, %v754
      %v756 = vpop.f32.mrb[0].mxu0
      %v757 = vadd.f32 0.0, %v756
      %758 = vmatprep.mubr.f32.mxu0 0.0
      %759 = vmatmul.mubr.f32.gmra.mrb[0].mxu0 %v515
      %v760 = vpop.f32.mrb[0].mxu0
      %v761 = vadd.f32 0.0, %v760
      %v762 = vpop.f32.mrb[0].mxu0
      %v763 = vadd.f32 0.0, %v762
      %764 = vmatprep.mubr.f32.mxu0 0.0
      %765 = vmatmul.mubr.f32.gmra.mrb[0].mxu0 %v518
      %v766 = vpop.f32.mrb[0].mxu0
      %v767 = vadd.f32 0.0, %v766
      %v768 = vpop.f32.mrb[0].mxu0
      %v769 = vadd.f32 0.0, %v768
      %770 = vmatprep.mubr.f32.mxu0 0.0
      %771 = vmatmul.mubr.f32.gmra.mrb[0].mxu0 %v521
      %v772 = vpop.f32.mrb[0].mxu0
      %v773 = vadd.f32 0.0, %v772
      %v774 = vpop.f32.mrb[0].mxu0
      %v775 = vadd.f32 0.0, %v774
      %776 = vmatprep.mubr.f32.mxu0 0.0
      %777 = vmatmul.mubr.f32.gmra.mrb[0].mxu0 %v524
      %v778 = vpop.f32.mrb[0].mxu0
      %v779 = vadd.f32 0.0, %v778
      %v780 = vpop.f32.mrb[0].mxu0
      %v781 = vadd.f32 0.0, %v780
      %782 = vdwg.mxu0
      %v783 = vmax.f32 %v593, %v605
      %v784 = vmax.f32 %v599, %v611
      %v785 = vmax.f32 %v783, %v617
      %v786 = vmax.f32 %v784, %v623
      %v787 = vmax.f32 %v785, %v629
      %v788 = vmax.f32 %v786, %v635
      %v789 = vmax.f32 %v787, %v641
      %v790 = vmax.f32 %v788, %v647
      %v791 = vmax.f32 %v789, %v653
      %v792 = vmax.f32 %v790, %v659
      %v793 = vmax.f32 %v791, %v665
      %v794 = vmax.f32 %v792, %v671
      %v795 = vmax.f32 %v793, %v677
      %v796 = vmax.f32 %v794, %v683
      %v797 = vmax.f32 %v795, %v689
      %v798 = vmax.f32 %v796, %v695
      %v799 = vmax.f32 %v797, %v701
      %v800 = vmax.f32 %v798, %v707
      %v801 = vmax.f32 %v799, %v713
      %v802 = vmax.f32 %v800, %v719
      %v803 = vmax.f32 %v801, %v725
      %v804 = vmax.f32 %v802, %v731
      %v805 = vmax.f32 %v803, %v737
      %v806 = vmax.f32 %v804, %v743
      %v807 = vmax.f32 %v805, %v749
      %v808 = vmax.f32 %v806, %v755
      %v809 = vmax.f32 %v807, %v761
      %v810 = vmax.f32 %v808, %v767
      %v811 = vmax.f32 %v809, %v773
      %v812 = vmax.f32 %v810, %v779
      %v813 = vmax.f32 %v811, %v812
      %v814 = vrot.slane %v813, 4
      %v815 = vmax.f32 %v813, %v814
      %v816 = vrot.slane %v815, 2
      %v817 = vmax.f32 %v815, %v816
      %v818 = vrot.slane %v817, 1
      %v819 = vmax.f32 %v817, %v818
      %v820 = vmax.f32 %v595, %v607
      %v821 = vmax.f32 %v601, %v613
      %v822 = vmax.f32 %v820, %v619
      %v823 = vmax.f32 %v821, %v625
      %v824 = vmax.f32 %v822, %v631
      %v825 = vmax.f32 %v823, %v637
      %v826 = vmax.f32 %v824, %v643
      %v827 = vmax.f32 %v825, %v649
      %v828 = vmax.f32 %v826, %v655
      %v829 = vmax.f32 %v827, %v661
      %v830 = vmax.f32 %v828, %v667
      %v831 = vmax.f32 %v829, %v673
      %v832 = vmax.f32 %v830, %v679
      %v833 = vmax.f32 %v831, %v685
      %v834 = vmax.f32 %v832, %v691
      %v835 = vmax.f32 %v833, %v697
      %v836 = vmax.f32 %v834, %v703
      %v837 = vmax.f32 %v835, %v709
      %v838 = vmax.f32 %v836, %v715
      %v839 = vmax.f32 %v837, %v721
      %v840 = vmax.f32 %v838, %v727
      %v841 = vmax.f32 %v839, %v733
      %v842 = vmax.f32 %v840, %v739
      %v843 = vmax.f32 %v841, %v745
      %v844 = vmax.f32 %v842, %v751
      %v845 = vmax.f32 %v843, %v757
      %v846 = vmax.f32 %v844, %v763
      %v847 = vmax.f32 %v845, %v769
      %v848 = vmax.f32 %v846, %v775
      %v849 = vmax.f32 %v847, %v781
      %v850 = vmax.f32 %v848, %v849
      %v851 = vrot.slane %v850, 4
      %v852 = vmax.f32 %v850, %v851
      %v853 = vrot.slane %v852, 2
      %v854 = vmax.f32 %v852, %v853
      %v855 = vrot.slane %v854, 1
      %v856 = vmax.f32 %v854, %v855
      %v857 = vsub.f32 %v593, %v819
      %v858 = vsub.f32 %v595, %v856
      %v859 = vsub.f32 %v599, %v819
      %v860 = vsub.f32 %v601, %v856
      %v861 = vsub.f32 %v605, %v819
      %v862 = vsub.f32 %v607, %v856
      %v863 = vsub.f32 %v611, %v819
      %v864 = vsub.f32 %v613, %v856
      %v865 = vsub.f32 %v617, %v819
      %v866 = vsub.f32 %v619, %v856
      %v867 = vsub.f32 %v623, %v819
      %v868 = vsub.f32 %v625, %v856
      %v869 = vsub.f32 %v629, %v819
      %v870 = vsub.f32 %v631, %v856
      %v871 = vsub.f32 %v635, %v819
      %v872 = vsub.f32 %v637, %v856
      %v873 = vsub.f32 %v641, %v819
      %v874 = vsub.f32 %v643, %v856
      %v875 = vsub.f32 %v647, %v819
      %v876 = vsub.f32 %v649, %v856
      %v877 = vsub.f32 %v653, %v819
      %v878 = vsub.f32 %v655, %v856
      %v879 = vsub.f32 %v659, %v819
      %v880 = vsub.f32 %v661, %v856
      %v881 = vsub.f32 %v665, %v819
      %v882 = vsub.f32 %v667, %v856
      %v883 = vsub.f32 %v671, %v819
      %v884 = vsub.f32 %v673, %v856
      %v885 = vsub.f32 %v677, %v819
      %v886 = vsub.f32 %v679, %v856
      %v887 = vsub.f32 %v683, %v819
      %v888 = vsub.f32 %v685, %v856
      %v889 = vsub.f32 %v689, %v819
      %v890 = vsub.f32 %v691, %v856
      %v891 = vsub.f32 %v695, %v819
      %v892 = vsub.f32 %v697, %v856
      %v893 = vsub.f32 %v701, %v819
      %v894 = vsub.f32 %v703, %v856
      %v895 = vsub.f32 %v707, %v819
      %v896 = vsub.f32 %v709, %v856
      %v897 = vsub.f32 %v713, %v819
      %v898 = vsub.f32 %v715, %v856
      %v899 = vsub.f32 %v719, %v819
      %v900 = vsub.f32 %v721, %v856
      %v901 = vsub.f32 %v725, %v819
      %v902 = vsub.f32 %v727, %v856
      %v903 = vsub.f32 %v731, %v819
      %v904 = vsub.f32 %v733, %v856
      %v905 = vsub.f32 %v737, %v819
      %v906 = vsub.f32 %v739, %v856
      %v907 = vsub.f32 %v743, %v819
      %v908 = vsub.f32 %v745, %v856
      %v909 = vsub.f32 %v749, %v819
      %v910 = vsub.f32 %v751, %v856
      %v911 = vsub.f32 %v755, %v819
      %v912 = vsub.f32 %v757, %v856
      %v913 = vsub.f32 %v761, %v819
      %v914 = vsub.f32 %v763, %v856
      %v915 = vsub.f32 %v767, %v819
      %v916 = vsub.f32 %v769, %v856
      %v917 = vsub.f32 %v773, %v819
      %v918 = vsub.f32 %v775, %v856
      %v919 = vsub.f32 %v779, %v819
      %v920 = vsub.f32 %v781, %v856
      %v921 = vmul.f32 %v857, 1.442695
      %v922 = vpow.pop %v921
      %v923 = vmul.f32 %v858, 1.442695
      %v924 = vpow.pop %v923
      %v925 = vmul.f32 %v859, 1.442695
      %v926 = vpow.pop %v925
      %v927 = vmul.f32 %v860, 1.442695
      %v928 = vpow.pop %v927
      %v929 = vmul.f32 %v861, 1.442695
      %v930 = vpow.pop %v929
      %v931 = vmul.f32 %v862, 1.442695
      %v932 = vpow.pop %v931
      %v933 = vmul.f32 %v863, 1.442695
      %v934 = vpow.pop %v933
      %v935 = vmul.f32 %v864, 1.442695
      %v936 = vpow.pop %v935
      %v937 = vmul.f32 %v865, 1.442695
      %v938 = vpow.pop %v937
      %v939 = vmul.f32 %v866, 1.442695
      %v940 = vpow.pop %v939
      %v941 = vmul.f32 %v867, 1.442695
      %v942 = vpow.pop %v941
      %v943 = vmul.f32 %v868, 1.442695
      %v944 = vpow.pop %v943
      %v945 = vmul.f32 %v869, 1.442695
      %v946 = vpow.pop %v945
      %v947 = vmul.f32 %v870, 1.442695
      %v948 = vpow.pop %v947
      %v949 = vmul.f32 %v871, 1.442695
      %v950 = vpow.pop %v949
      %v951 = vmul.f32 %v872, 1.442695
      %v952 = vpow.pop %v951
      %v953 = vmul.f32 %v873, 1.442695
      %v954 = vpow.pop %v953
      %v955 = vmul.f32 %v874, 1.442695
      %v956 = vpow.pop %v955
      %v957 = vmul.f32 %v875, 1.442695
      %v958 = vpow.pop %v957
      %v959 = vmul.f32 %v876, 1.442695
      %v960 = vpow.pop %v959
      %v961 = vmul.f32 %v877, 1.442695
      %v962 = vpow.pop %v961
      %v963 = vmul.f32 %v878, 1.442695
      %v964 = vpow.pop %v963
      %v965 = vmul.f32 %v879, 1.442695
      %v966 = vpow.pop %v965
      %v967 = vmul.f32 %v880, 1.442695
      %v968 = vpow.pop %v967
      %v969 = vmul.f32 %v881, 1.442695
      %v970 = vpow.pop %v969
      %v971 = vmul.f32 %v882, 1.442695
      %v972 = vpow.pop %v971
      %v973 = vmul.f32 %v883, 1.442695
      %v974 = vpow.pop %v973
      %v975 = vmul.f32 %v884, 1.442695
      %v976 = vpow.pop %v975
      %v977 = vmul.f32 %v885, 1.442695
      %v978 = vpow.pop %v977
      %v979 = vmul.f32 %v886, 1.442695
      %v980 = vpow.pop %v979
      %v981 = vmul.f32 %v887, 1.442695
      %v982 = vpow.pop %v981
      %v983 = vmul.f32 %v888, 1.442695
      %v984 = vpow.pop %v983
      %v985 = vmul.f32 %v889, 1.442695
      %v986 = vpow.pop %v985
      %v987 = vmul.f32 %v890, 1.442695
      %v988 = vpow.pop %v987
      %v989 = vmul.f32 %v891, 1.442695
      %v990 = vpow.pop %v989
      %v991 = vmul.f32 %v892, 1.442695
      %v992 = vpow.pop %v991
      %v993 = vmul.f32 %v893, 1.442695
      %v994 = vpow.pop %v993
      %v995 = vmul.f32 %v894, 1.442695
      %v996 = vpow.pop %v995
      %v997 = vmul.f32 %v895, 1.442695
      %v998 = vpow.pop %v997
      %v999 = vmul.f32 %v896, 1.442695
      %v1000 = vpow.pop %v999
      %v1001 = vmul.f32 %v897, 1.442695
      %v1002 = vpow.pop %v1001
      %v1003 = vmul.f32 %v898, 1.442695
      %v1004 = vpow.pop %v1003
      %v1005 = vmul.f32 %v899, 1.442695
      %v1006 = vpow.pop %v1005
      %v1007 = vmul.f32 %v900, 1.442695
      %v1008 = vpow.pop %v1007
      %v1009 = vmul.f32 %v901, 1.442695
      %v1010 = vpow.pop %v1009
      %v1011 = vmul.f32 %v902, 1.442695
      %v1012 = vpow.pop %v1011
      %v1013 = vmul.f32 %v903, 1.442695
      %v1014 = vpow.pop %v1013
      %v1015 = vmul.f32 %v904, 1.442695
      %v1016 = vpow.pop %v1015
      %v1017 = vmul.f32 %v905, 1.442695
      %v1018 = vpow.pop %v1017
      %v1019 = vmul.f32 %v906, 1.442695
      %v1020 = vpow.pop %v1019
      %v1021 = vmul.f32 %v907, 1.442695
      %v1022 = vpow.pop %v1021
      %v1023 = vmul.f32 %v908, 1.442695
      %v1024 = vpow.pop %v1023
      %v1025 = vmul.f32 %v909, 1.442695
      %v1026 = vpow.pop %v1025
      %v1027 = vmul.f32 %v910, 1.442695
      %v1028 = vpow.pop %v1027
      %v1029 = vmul.f32 %v911, 1.442695
      %v1030 = vpow.pop %v1029
      %v1031 = vmul.f32 %v912, 1.442695
      %v1032 = vpow.pop %v1031
      %v1033 = vmul.f32 %v913, 1.442695
      %v1034 = vpow.pop %v1033
      %v1035 = vmul.f32 %v914, 1.442695
      %v1036 = vpow.pop %v1035
      %v1037 = vmul.f32 %v915, 1.442695
      %v1038 = vpow.pop %v1037
      %v1039 = vmul.f32 %v916, 1.442695
      %v1040 = vpow.pop %v1039
      %v1041 = vmul.f32 %v917, 1.442695
      %v1042 = vpow.pop %v1041
      %v1043 = vmul.f32 %v918, 1.442695
      %v1044 = vpow.pop %v1043
      %v1045 = vmul.f32 %v919, 1.442695
      %v1046 = vpow.pop %v1045
      %v1047 = vmul.f32 %v920, 1.442695
      %v1048 = vpow.pop %v1047
      %v1049 = vadd.f32 %v922, %v926
      %v1050 = vadd.f32 %v1049, %v930
      %v1051 = vadd.f32 %v1050, %v934
      %v1052 = vadd.f32 %v1051, %v938
      %v1053 = vadd.f32 %v1052, %v942
      %v1054 = vadd.f32 %v1053, %v946
      %v1055 = vadd.f32 %v1054, %v950
      %v1056 = vadd.f32 %v1055, %v954
      %v1057 = vadd.f32 %v1056, %v958
      %v1058 = vadd.f32 %v1057, %v962
      %v1059 = vadd.f32 %v1058, %v966
      %v1060 = vadd.f32 %v1059, %v970
      %v1061 = vadd.f32 %v1060, %v974
      %v1062 = vadd.f32 %v1061, %v978
      %v1063 = vadd.f32 %v1062, %v982
      %v1064 = vadd.f32 %v1063, %v986
      %v1065 = vadd.f32 %v1064, %v990
      %v1066 = vadd.f32 %v1065, %v994
      %v1067 = vadd.f32 %v1066, %v998
      %v1068 = vadd.f32 %v1067, %v1002
      %v1069 = vadd.f32 %v1068, %v1006
      %v1070 = vadd.f32 %v1069, %v1010
      %v1071 = vadd.f32 %v1070, %v1014
      %v1072 = vadd.f32 %v1071, %v1018
      %v1073 = vadd.f32 %v1072, %v1022
      %v1074 = vadd.f32 %v1073, %v1026
      %v1075 = vadd.f32 %v1074, %v1030
      %v1076 = vadd.f32 %v1075, %v1034
      %v1077 = vadd.f32 %v1076, %v1038
      %v1078 = vadd.f32 %v1077, %v1042
      %v1079 = vadd.f32 %v1078, %v1046
      %v1080 = vrot.slane %v1079, 4
      %v1081 = vadd.f32 %v1079, %v1080
      %v1082 = vrot.slane %v1081, 2
      %v1083 = vadd.f32 %v1081, %v1082
      %v1084 = vrot.slane %v1083, 1
      %v1085 = vadd.f32 %v1083, %v1084
      %v1086 = vadd.f32 %v924, %v928
      %v1087 = vadd.f32 %v1086, %v932
      %v1088 = vadd.f32 %v1087, %v936
      %v1089 = vadd.f32 %v1088, %v940
      %v1090 = vadd.f32 %v1089, %v944
      %v1091 = vadd.f32 %v1090, %v948
      %v1092 = vadd.f32 %v1091, %v952
      %v1093 = vadd.f32 %v1092, %v956
      %v1094 = vadd.f32 %v1093, %v960
      %v1095 = vadd.f32 %v1094, %v964
      %v1096 = vadd.f32 %v1095, %v968
      %v1097 = vadd.f32 %v1096, %v972
      %v1098 = vadd.f32 %v1097, %v976
      %v1099 = vadd.f32 %v1098, %v980
      %v1100 = vadd.f32 %v1099, %v984
      %v1101 = vadd.f32 %v1100, %v988
      %v1102 = vadd.f32 %v1101, %v992
      %v1103 = vadd.f32 %v1102, %v996
      %v1104 = vadd.f32 %v1103, %v1000
      %v1105 = vadd.f32 %v1104, %v1004
      %v1106 = vadd.f32 %v1105, %v1008
      %v1107 = vadd.f32 %v1106, %v1012
      %v1108 = vadd.f32 %v1107, %v1016
      %v1109 = vadd.f32 %v1108, %v1020
      %v1110 = vadd.f32 %v1109, %v1024
      %v1111 = vadd.f32 %v1110, %v1028
      %v1112 = vadd.f32 %v1111, %v1032
      %v1113 = vadd.f32 %v1112, %v1036
      %v1114 = vadd.f32 %v1113, %v1040
      %v1115 = vadd.f32 %v1114, %v1044
      %v1116 = vadd.f32 %v1115, %v1048
      %v1117 = vrot.slane %v1116, 4
      %v1118 = vadd.f32 %v1116, %v1117
      %v1119 = vrot.slane %v1118, 2
      %v1120 = vadd.f32 %v1118, %v1119
      %v1121 = vrot.slane %v1120, 1
      %v1122 = vadd.f32 %v1120, %v1121
      %v1123 = vrcp.pop %v1085
      %v1124 = vrcp.pop %v1122
      %v1125 = vmul.f32 %v359, %v1123
      %v1126 = vmul.f32 %v361, %v1124
      %v1127 = vpack.c.bf16 %v1125, %v1125
      %v1128 = vpack.c.bf16 %v1126, %v1126
      %v1129 = vpack.c.bf16 %v926, %v922
      %v1130 = vpack.c.bf16 %v928, %v924
      %v1131 = vpack.c.bf16 %v934, %v930
      %v1132 = vpack.c.bf16 %v936, %v932
      %v1133 = vpack.c.bf16 %v942, %v938
      %v1134 = vpack.c.bf16 %v944, %v940
      %v1135 = vpack.c.bf16 %v950, %v946
      %v1136 = vpack.c.bf16 %v952, %v948
      %v1137 = vpack.c.bf16 %v958, %v954
      %v1138 = vpack.c.bf16 %v960, %v956
      %v1139 = vpack.c.bf16 %v966, %v962
      %v1140 = vpack.c.bf16 %v968, %v964
      %v1141 = vpack.c.bf16 %v974, %v970
      %v1142 = vpack.c.bf16 %v976, %v972
      %v1143 = vpack.c.bf16 %v982, %v978
      %v1144 = vpack.c.bf16 %v984, %v980
      %v1145 = vpack.c.bf16 %v990, %v986
      %v1146 = vpack.c.bf16 %v992, %v988
      %v1147 = vpack.c.bf16 %v998, %v994
      %v1148 = vpack.c.bf16 %v1000, %v996
      %v1149 = vpack.c.bf16 %v1006, %v1002
      %v1150 = vpack.c.bf16 %v1008, %v1004
      %v1151 = vpack.c.bf16 %v1014, %v1010
      %v1152 = vpack.c.bf16 %v1016, %v1012
      %v1153 = vpack.c.bf16 %v1022, %v1018
      %v1154 = vpack.c.bf16 %v1024, %v1020
      %v1155 = vpack.c.bf16 %v1030, %v1026
      %v1156 = vpack.c.bf16 %v1032, %v1028
      %v1157 = vpack.c.bf16 %v1038, %v1034
      %v1158 = vpack.c.bf16 %v1040, %v1036
      %v1159 = vpack.c.bf16 %v1046, %v1042
      %v1160 = vpack.c.bf16 %v1048, %v1044
      %1161 = vmatprep.subr.bf16.mxu0 %v1130
      %1162 = vmatpush1.bf16.xpose.msra.mxu0 %v1129
      %1163 = vmatprep.subr.bf16.mxu0 %v1132
      %1164 = vmatpush1.bf16.xpose.msra.mxu0 %v1131
      %1165 = vmatprep.subr.bf16.mxu0 %v1134
      %1166 = vmatpush1.bf16.xpose.msra.mxu0 %v1133
      %1167 = vmatprep.subr.bf16.mxu0 %v1136
      %1168 = vmatpush1.bf16.xpose.msra.mxu0 %v1135
      %1169 = vmatprep.subr.bf16.mxu0 %v1138
      %1170 = vmatpush1.bf16.xpose.msra.mxu0 %v1137
      %1171 = vmatprep.subr.bf16.mxu0 %v1140
      %1172 = vmatpush1.bf16.xpose.msra.mxu0 %v1139
      %1173 = vmatprep.subr.bf16.mxu0 %v1142
      %1174 = vmatpush1.bf16.xpose.msra.mxu0 %v1141
      %1175 = vmatprep.subr.bf16.mxu0 %v1144
      %1176 = vmatpush1.bf16.xpose.msra.mxu0 %v1143
      %1177 = vmatprep.subr.bf16.mxu0 %v1146
      %1178 = vmatpush1.bf16.xpose.msra.mxu0 %v1145
      %1179 = vmatprep.subr.bf16.mxu0 %v1148
      %1180 = vmatpush1.bf16.xpose.msra.mxu0 %v1147
      %1181 = vmatprep.subr.bf16.mxu0 %v1150
      %1182 = vmatpush1.bf16.xpose.msra.mxu0 %v1149
      %1183 = vmatprep.subr.bf16.mxu0 %v1152
      %1184 = vmatpush1.bf16.xpose.msra.mxu0 %v1151
      %1185 = vmatprep.subr.bf16.mxu0 %v1154
      %1186 = vmatpush1.bf16.xpose.msra.mxu0 %v1153
      %1187 = vmatprep.subr.bf16.mxu0 %v1156
      %1188 = vmatpush1.bf16.xpose.msra.mxu0 %v1155
      %1189 = vmatprep.subr.bf16.mxu0 %v1158
      %1190 = vmatpush1.bf16.xpose.msra.mxu0 %v1157
      %1191 = vmatprep.subr.bf16.mxu0 %v1160
      %1192 = vmatpush1.bf16.xpose.msra.mxu0 %v1159
      %1193 = vmatprep.mubr.bf16.mxu0 %v1128
      %1194 = vmatmul.mubr.bf16.gmra.mrb[0].mxu0 %v1127
      %v1195 = vpop.f32.mrb[0].mxu0
      %v1196 = vadd.f32 0.0, %v1195
      %v1197 = vpop.f32.mrb[0].mxu0
      %v1198 = vadd.f32 0.0, %v1197
      %v1199 = vpop.f32.mrb[0].mxu0
      %v1200 = vpop.f32.mrb[0].mxu0
      %1201 = vdwg.mxu0
      %v1202 = vld [vmem:[%s4] sm:$0xf]
      %v1203 = vld [vmem:[%s4 + $0x4] sm:$0xf]
      %v1204 = vld [vmem:[%s4 + $0x8] sm:$0xf]
      %v1205 = vld [vmem:[%s4 + $0xc] sm:$0xf]
      %v1206 = vpack.c.bf16 %v1196, %v1196
      %v1207 = vpack.c.bf16 %v1198, %v1198
      %v1208 = vld [vmem:[%s5] sm:$0xff]
      %v1209 = vld [vmem:[%s5 + $0x8] sm:$0xff]
      %v1210 = vld [vmem:[%s5 + $0x10] sm:$0xff]
      %v1211 = vld [vmem:[%s5 + $0x18] sm:$0xff]
      %1213 = vset.pattern.permute.xlu0 0
      %1214 = vperm.xlu0 %1213, %v1208
      %v1215 = vpop.permute.xlu0 %1214
      %1218 = vset.pattern.permute.xlu0 0
      %1219 = vperm.xlu0 %1218, %v1209
      %v1220 = vpop.permute.xlu0 %1219
      %1223 = vset.pattern.permute.xlu0 0
      %1224 = vperm.xlu0 %1223, %v1210
      %v1225 = vpop.permute.xlu0 %1224
      %1228 = vset.pattern.permute.xlu0 0
      %1229 = vperm.xlu0 %1228, %v1211
      %v1230 = vpop.permute.xlu0 %1229
      %v1236 = vunpack.c.l.b16 %v1202
      %v1237 = vunpack.c.l.b16 %v1203
      %v1238 = vunpack.c.l.b16 %v1204
      %v1239 = vunpack.c.l.b16 %v1205
      %v1240 = vpack.c.b16 %v1237, %v1236
      %v1241 = vpack.c.b16 %v1239, %v1238
      %v1243 = vsel %vm429, %v1240, 0
      %v1246 = vsel %vm429, %v1241, 0
      %vm1248 = vcmask 1043456
      %v1250 = vsel %vm1248, %v1206, 0
      %v1253 = vsel %vm1248, %v1207, 0
      %1255 = vmatprep.subr.bf16.mxu0 %v1253
      %1256 = vmatpush1.bf16.msra.mxu0 %v1250
      %1257 = vmatprep.subr.bf16.mxu0 0
      %1258 = vmatpush1.bf16.msra.mxu0 0
      %1259 = vmatprep.subr.bf16.mxu0 0
      %1260 = vmatpush1.bf16.msra.mxu0 0
      %1261 = vmatprep.subr.bf16.mxu0 0
      %1262 = vmatpush1.bf16.msra.mxu0 0
      %1263 = vmatprep.subr.bf16.mxu0 0
      %1264 = vmatpush1.bf16.msra.mxu0 0
      %1265 = vmatprep.subr.bf16.mxu0 0
      %1266 = vmatpush1.bf16.msra.mxu0 0
      %1267 = vmatprep.subr.bf16.mxu0 0
      %1268 = vmatpush1.bf16.msra.mxu0 0
      %1269 = vmatprep.subr.bf16.mxu0 0
      %1270 = vmatpush1.bf16.msra.mxu0 0
      %1271 = vmatprep.subr.bf16.mxu0 0
      %1272 = vmatpush1.bf16.msra.mxu0 0
      %1273 = vmatprep.subr.bf16.mxu0 0
      %1274 = vmatpush1.bf16.msra.mxu0 0
      %1275 = vmatprep.subr.bf16.mxu0 0
      %1276 = vmatpush1.bf16.msra.mxu0 0
      %1277 = vmatprep.subr.bf16.mxu0 0
      %1278 = vmatpush1.bf16.msra.mxu0 0
      %1279 = vmatprep.subr.bf16.mxu0 0
      %1280 = vmatpush1.bf16.msra.mxu0 0
      %1281 = vmatprep.subr.bf16.mxu0 0
      %1282 = vmatpush1.bf16.msra.mxu0 0
      %1283 = vmatprep.subr.bf16.mxu0 0
      %1284 = vmatpush1.bf16.msra.mxu0 0
      %1285 = vmatprep.subr.bf16.mxu0 0
      %1286 = vmatpush1.bf16.msra.mxu0 0
      %1287 = vmatprep.mubr.bf16.mxu0 0
      %1288 = vmatmul.mubr.bf16.gmra.mrb[0].mxu0 %v1243
      %v1289 = vpop.f32.mrb[0].mxu0
      %v1290 = vadd.f32 %v1215, %v1289
      %v1291 = vpop.f32.mrb[0].mxu0
      %v1292 = vadd.f32 %v1215, %v1291
      %v1293 = vpop.f32.mrb[0].mxu0
      %v1294 = vadd.f32 %v1220, %v1293
      %v1295 = vpop.f32.mrb[0].mxu0
      %v1296 = vadd.f32 %v1220, %v1295
      %1297 = vmatprep.mubr.bf16.mxu0 0
      %1298 = vmatmul.mubr.bf16.gmra.mrb[0].mxu0 %v1246
      %v1299 = vpop.f32.mrb[0].mxu0
      %v1300 = vadd.f32 %v1225, %v1299
      %v1301 = vpop.f32.mrb[0].mxu0
      %v1302 = vadd.f32 %v1225, %v1301
      %v1303 = vpop.f32.mrb[0].mxu0
      %v1304 = vadd.f32 %v1230, %v1303
      %v1305 = vpop.f32.mrb[0].mxu0
      %v1306 = vadd.f32 %v1230, %v1305
      %1307 = vdwg.mxu0
      %s1308 = sld [smem:[#allocation2]]
      %v1309 = vstv %s1308
      %v1310 = vmul.f32 %v1309, %v1290
      %v1311 = vmul.f32 %v1309, %v1292
      %v1312 = vmul.f32 %v1309, %v1294
      %v1313 = vmul.f32 %v1309, %v1296
      %v1314 = vmul.f32 %v1309, %v1300
      %v1315 = vmul.f32 %v1309, %v1302
      %v1316 = vmul.f32 %v1309, %v1304
      %v1317 = vmul.f32 %v1309, %v1306
      %1318 = vst [vmem:[%s252] sm:$0xff] %v1310
      %1319 = vst [vmem:[%s252 + $0x8] sm:$0xff] %v1311
      %1320 = vst [vmem:[%s252 + $0x10] sm:$0xff] %v1312
      %1321 = vst [vmem:[%s252 + $0x18] sm:$0xff] %v1313
      %1322 = vst [vmem:[%s252 + $0x20] sm:$0xff] %v1314
      %1323 = vst [vmem:[%s252 + $0x28] sm:$0xff] %v1315
      %1324 = vst [vmem:[%s252 + $0x30] sm:$0xff] %v1316
      %1325 = vst [vmem:[%s252 + $0x38] sm:$0xff] %v1317
      %p1326 = scmp.lt.s32.totalorder %s18, 1
      %s1327 = scalar_select %p1326, %s18, 1
      %s1328 = smul.addr %s1327, 8
      %s1329 = smul.addr %s1328, 8
      %s1330 = scalar_lea.vmem %s6, %s1329
      // Predicated region
      $region45: #{self_attention.1} parent=43 // pred_check
        %p1331 = pneg %p167
      $region46: #{self_attention.1} parent=43 // pred_check_branch
        %1333 = sbr.rel (%p1331) target = $region48
      $region47: #{self_attention.1} parent=43 // pred_region
        _
      $region48: #{self_attention.1} parent=43 // pred_fallthru
        _
    $region44: #{self_attention.1} parent=5 // pred_fallthru
      _
    %p1334 = scmp.le.s32.totalorder 2, %s13
    // Predicated region
    $region49: #{self_attention.1} parent=5 // pred_check
      %p1335 = pneg %p1334
    $region50: #{self_attention.1} parent=5 // pred_check_branch
      %1337 = sbr.rel (%p1335) target = $region52
    $region51: #{self_attention.1} parent=5 // pred_region
      %s1338 = ssub.s32 %s13, 2
      // Predicated region
      $region53: #{self_attention.1} parent=51 // pred_check
        %p1339 = pneg %p173
      $region54: #{self_attention.1} parent=51 // pred_check_branch
        %1341 = sbr.rel (%p1339) target = $region56
      $region55: #{self_attention.1} parent=51 // pred_region
        %p1342 = scmp.lt.s32.totalorder %s19, 1
        %s1343 = scalar_select %p1342, %s19, 1
        %s1344 = smul.addr %s1343, 8
        %s1345 = smul.addr %s1344, 8
        %s1346 = scalar_lea.vmem %s6, %s1345
      $region56: #{self_attention.1} parent=51 // pred_fallthru
        _
    $region52: #{self_attention.1} parent=5 // pred_fallthru
      _
  $region6: #{self_attention.1} parent=0 // loop_footer
    %s17 = sadd.s32 1, %s13
  $region7: #{self_attention.1} parent=0 // loop_footer_branch
    %12 = sbr.rel target = $region3
  $region8: #{self_attention.1} parent=0 // loop_exit
    _

</llo_original>
